<compile_context>
chip_gen: v7x
topology: tpu7x:2x2x1
jax: 0.10.0
libtpu: 0.0.40
codegen_flags: <defaults>
</compile_context>

<pallas_src>
import jax
import jax.numpy as jnp
from jax.experimental import pallas as pl
from jax.experimental.pallas import tpu as pltpu

# ---------------------------------------------------------------------------
# Static problem configuration (toy shapes) and single-slab layout (row offsets).
# ---------------------------------------------------------------------------
AUTHOR_IN    = 12
HIDDEN       = 32
OUT_CHANNELS = 8
NUM_PAPERS   = 16
NUM_AUTHORS  = 10
NUM_EDGES    = 30

A_PAD = 16                  # authors zero-padded to 16 rows (== NUM_PAPERS)
LANE  = 128                 # every slab block is 128 lanes wide (full-vreg)

# Row offsets inside the single (ROWS, 128) bf16 slab.
R_XA    = 0                     # (16,128) author feats   (rows 0:10, lanes 0:12 real)
R_EP    = R_XA + A_PAD          # 16   (16,128) paper embedding table (lanes 0:32)
R_ADJ   = R_EP + NUM_PAPERS     # 32   (32,128) block-diag mean adjacency (lanes 0:32)
R_BPROJ = R_ADJ + 32            # 64   pre-broadcast biases, 16 rows each
R_BL1P  = R_BPROJ + 16          # 80
R_BL1A  = R_BL1P + 16           # 96
R_BL2P  = R_BL1A + 16           # 112
R_BLIN1 = R_BL2P + 16           # 128
R_BLIN2 = R_BLIN1 + 16          # 144
R_WPROJ = R_BLIN2 + 16          # 160  weights: (128,128) blocks, zero-padded K and N
R_WL1P  = R_WPROJ + LANE        # 288
R_WR1P  = R_WL1P + LANE         # 416
R_WL1A  = R_WR1P + LANE         # 544
R_WR1A  = R_WL1A + LANE         # 672
R_WL2P  = R_WR1A + LANE         # 800
R_WR2P  = R_WL2P + LANE         # 928
R_WLIN1 = R_WR2P + LANE         # 1056
R_WLIN2 = R_WLIN1 + LANE        # 1184
ROWS    = R_WLIN2 + LANE        # 1312  -> slab ~336 KB bf16 (trivial in VMEM)


# ---------------------------------------------------------------------------
# Pallas kernel: whole forward pass, 1 packed input slab -> 1 lane-dense output.
# ---------------------------------------------------------------------------
def _gnn_kernel(s_ref, out_ref):
    f32, bf16 = jnp.float32, jnp.bfloat16
    P, A = NUM_PAPERS, A_PAD

    def mxu(a, b):  # bf16 operands on the MXU, f32 accumulation
        return jnp.dot(a.astype(bf16), b.astype(bf16), preferred_element_type=f32)

    # ---- static slices of the packed slab (no extra DMAs, full-lane loads) ----
    x_a   = s_ref[R_XA:R_XA + A, :]                 # (16,128) bf16
    h_p0  = s_ref[R_EP:R_EP + P, :]                 # (16,128) bf16
    adj   = s_ref[R_ADJ:R_ADJ + P + A, 0:P + A]     # (32,32)  [[apa,0],[0,aap]]
    apa   = s_ref[R_ADJ:R_ADJ + P, 0:A]             # (16,16)  top-left block (conv2)

    wproj = s_ref[R_WPROJ:R_WPROJ + LANE, :]
    wl1p  = s_ref[R_WL1P:R_WL1P + LANE, :]
    wr1p  = s_ref[R_WR1P:R_WR1P + LANE, :]
    wl1a  = s_ref[R_WL1A:R_WL1A + LANE, :]
    wr1a  = s_ref[R_WR1A:R_WR1A + LANE, :]
    wl2p  = s_ref[R_WL2P:R_WL2P + LANE, :]
    wr2p  = s_ref[R_WR2P:R_WR2P + LANE, :]
    wlin1 = s_ref[R_WLIN1:R_WLIN1 + LANE, :]
    wlin2 = s_ref[R_WLIN2:R_WLIN2 + LANE, :]

    # Pre-broadcast (16,128) bias blocks -> no broadcast_in_dim on the chain.
    b_proj = s_ref[R_BPROJ:R_BPROJ + P, :].astype(f32)
    b_l1p  = s_ref[R_BL1P:R_BL1P + P, :].astype(f32)
    b_l1a  = s_ref[R_BL1A:R_BL1A + P, :].astype(f32)
    b_l2p  = s_ref[R_BL2P:R_BL2P + P, :].astype(f32)
    b_lin1 = s_ref[R_BLIN1:R_BLIN1 + P, :].astype(f32)
    b_lin2 = s_ref[R_BLIN2:R_BLIN2 + P, :].astype(f32)

    # ---- author projection (papers use the embedding table directly) ----------
    h_a0  = mxu(x_a, wproj) + b_proj                # (16,128) f32
    h_a0b = h_a0.astype(bf16)

    # ---- conv1: BOTH mean aggregations in one block-diagonal matmul -----------
    h0   = jnp.concatenate([h_a0b, h_p0], axis=0)   # (32,128) bf16 [authors; papers]
    agg1 = mxu(adj, h0).astype(bf16)                # rows 0:16 paper-agg, 16:32 author-agg

    # SAGEConv: relu(lin_l(mean_agg) + lin_r(self) + b)   (lin_r is bias-free in PyG)
    h_p1 = jnp.maximum(mxu(agg1[0:P], wl1p) + mxu(h_p0, wr1p) + b_l1p, 0.0)
    h_a1 = jnp.maximum(mxu(agg1[P:P + A], wl1a) + mxu(h_a0b, wr1a) + b_l1a, 0.0)
    h_p1b = h_p1.astype(bf16)
    h_a1b = h_a1.astype(bf16)

    # ---- conv2, paper branch only (author branch never reaches the output) ----
    agg2 = mxu(apa, h_a1b)                          # (16,128) f32
    h_p2 = jnp.maximum(mxu(agg2, wl2p) + mxu(h_p1b, wr2p) + b_l2p, 0.0)

    # ---- readout head: relu(lin1(x)) -> lin2, lane-dense 128-wide store -------
    h = jnp.maximum(mxu(h_p2, wlin1) + b_lin1, 0.0)
    out_ref[...] = mxu(h, wlin2) + b_lin2


def bipartite_citation_gnn_forward(slab, out_channels):
    P, A, L = NUM_PAPERS, A_PAD, LANE
    flops = 2 * (9 * P * L * L          # proj, 4x conv1, 2x conv2, lin1, lin2 (padded)
                 + (P + A) * (P + A) * L  # block-diag aggregation (conv1)
                 + P * A * L)             # conv2 aggregation
    bytes_accessed = slab.size * slab.dtype.itemsize + P * L * 4
    vmem = pl.BlockSpec(memory_space=pltpu.MemorySpace.VMEM)
    out_padded = pl.pallas_call(
        _gnn_kernel,
        out_shape=jax.ShapeDtypeStruct((P, L), jnp.float32),
        in_specs=[vmem],
        out_specs=vmem,
        cost_estimate=pl.CostEstimate(flops=flops, transcendentals=0,
                                      bytes_accessed=bytes_accessed),
    )(slab)
    return out_padded[:, :out_channels]


# ---------------------------------------------------------------------------
# One-time host-side prep: dense mean adjacency + slab packing (NOT hot path).
# ---------------------------------------------------------------------------
def build_mean_adj(src_idx, dst_idx, n_src, n_dst):
    a = jnp.zeros((n_dst, n_src), jnp.float32).at[dst_idx, src_idx].add(1.0)
    deg = a.sum(axis=1, keepdims=True)
    return a / jnp.maximum(deg, 1.0)   # rows with no in-edges stay all-zero (PyG mean -> 0)


def pack_slab(x_author, paper_emb, apa, aap, p):
    # bf16 quantisation of features/adjacency/biases adds ~1e-3 relative rounding vs
    # the f32 reference (covered by the loose tolerance); keep an f32 slab if closer
    # parity is ever needed.
    assert x_author.shape == (NUM_AUTHORS, AUTHOR_IN) and NUM_AUTHORS <= A_PAD
    assert AUTHOR_IN <= HIDDEN and OUT_CHANNELS <= LANE and HIDDEN <= LANE
    H = HIDDEN
    s = jnp.zeros((ROWS, LANE), jnp.float32)

    # data blocks
    s = s.at[R_XA:R_XA + NUM_AUTHORS, :AUTHOR_IN].set(x_author)
    s = s.at[R_EP:R_EP + NUM_PAPERS, :H].set(paper_emb)
    # block-diagonal mean adjacency: rows 0:16 papers<-authors, rows 16:32 authors<-papers
    s = s.at[R_ADJ:R_ADJ + NUM_PAPERS, :NUM_AUTHORS].set(apa)
    s = s.at[R_ADJ + NUM_PAPERS:R_ADJ + NUM_PAPERS + NUM_AUTHORS,
             A_PAD:A_PAD + NUM_PAPERS].set(aap)

    # pre-broadcast biases (16 rows each)
    def set_b(s, off, b):
        return s.at[off:off + NUM_PAPERS, :b.shape[1]].set(
            jnp.broadcast_to(b, (NUM_PAPERS, b.shape[1])))
    s = set_b(s, R_BPROJ, p["b_proj"])
    s = set_b(s, R_BL1P,  p["b_l1_w"])
    s = set_b(s, R_BL1A,  p["b_l1_wb"])
    s = set_b(s, R_BL2P,  p["b_l2_w"])
    s = set_b(s, R_BLIN1, p["b_lin1"])
    s = set_b(s, R_BLIN2, p["b_lin2"])

    # weights, zero-padded to (128,128) blocks (K rows and N lanes padded with zeros)
    def set_w(s, off, w):
        return s.at[off:off + w.shape[0], :w.shape[1]].set(w)
    s = set_w(s, R_WPROJ, p["w_proj"])
    s = set_w(s, R_WL1P,  p["w_l1_w"])
    s = set_w(s, R_WR1P,  p["w_r1_w"])
    s = set_w(s, R_WL1A,  p["w_l1_wb"])
    s = set_w(s, R_WR1A,  p["w_r1_wb"])
    s = set_w(s, R_WL2P,  p["w_l2_w"])
    s = set_w(s, R_WR2P,  p["w_r2_w"])
    s = set_w(s, R_WLIN1, p["w_lin1"])
    s = set_w(s, R_WLIN2, p["w_lin2"])
    return s.astype(jnp.bfloat16)


def init_params(key, author_in, hidden, out_channels):
    ks = jax.random.split(key, 32)
    it = iter(range(32))
    def mat(shape, scale=0.1):
        return (scale * jax.random.normal(ks[next(it)], shape)).astype(jnp.float32)
    return {
        "w_proj": mat((author_in, hidden)), "b_proj": mat((1, hidden)),
        "w_l1_w": mat((hidden, hidden)), "b_l1_w": mat((1, hidden)), "w_r1_w": mat((hidden, hidden)),
        "w_l1_wb": mat((hidden, hidden)), "b_l1_wb": mat((1, hidden)), "w_r1_wb": mat((hidden, hidden)),
        "w_l2_w": mat((hidden, hidden)), "b_l2_w": mat((1, hidden)), "w_r2_w": mat((hidden, hidden)),
        "w_lin1": mat((hidden, hidden)), "b_lin1": mat((1, hidden)),
        "w_lin2": mat((hidden, out_channels)), "b_lin2": mat((1, out_channels)),
    }


def _reference_forward(x_author, paper_emb, apa, aap, p):
    relu = lambda v: jnp.maximum(v, 0.0)
    h_a0 = x_author @ p["w_proj"] + p["b_proj"]
    h_p0 = paper_emb
    h_p1 = relu((apa @ h_a0) @ p["w_l1_w"] + p["b_l1_w"] + h_p0 @ p["w_r1_w"])
    h_a1 = relu((aap @ h_p0) @ p["w_l1_wb"] + p["b_l1_wb"] + h_a0 @ p["w_r1_wb"])
    h_p2 = relu((apa @ h_a1) @ p["w_l2_w"] + p["b_l2_w"] + h_p1 @ p["w_r2_w"])
    h = relu(h_p2 @ p["w_lin1"] + p["b_lin1"])
    return h @ p["w_lin2"] + p["b_lin2"]


if __name__ == "__main__":
    key = jax.random.PRNGKey(0)
    k_x, k_emb, k_src, k_dst, k_par = jax.random.split(key, 5)

    x_author = jax.random.normal(k_x, (NUM_AUTHORS, AUTHOR_IN), jnp.float32)
    paper_emb = jax.random.normal(k_emb, (NUM_PAPERS, HIDDEN), jnp.float32)
    authors = jax.random.randint(k_src, (NUM_EDGES,), 0, NUM_AUTHORS)
    papers = jax.random.randint(k_dst, (NUM_EDGES,), 0, NUM_PAPERS)
    params = init_params(k_par, AUTHOR_IN, HIDDEN, OUT_CHANNELS)

    # Precomputed ONCE (hoisted out of the per-forward hot path).
    apa = build_mean_adj(authors, papers, NUM_AUTHORS, NUM_PAPERS)   # (P, A) writes
    aap = build_mean_adj(papers, authors, NUM_PAPERS, NUM_AUTHORS)   # (A, P) written_by
    slab = pack_slab(x_author, paper_emb, apa, aap, params)

    out = bipartite_citation_gnn_forward(slab, OUT_CHANNELS)
    out = jax.block_until_ready(out)
    assert out.shape == (NUM_PAPERS, OUT_CHANNELS)

    # Pure-JAX f32 reference check (loose tolerance: kernel uses bf16 MXU operands
    # and bf16-packed inputs).
    ref = _reference_forward(x_author, paper_emb, apa, aap, params)
    max_err = float(jnp.max(jnp.abs(out - ref)))
    assert max_err < 1e-1, f"max abs err vs reference: {max_err}"

    print("KERNEL_OK")
</pallas_src>

<mosaic_0001>
module attributes {stable_mosaic.version = 11 : i64} {
  func.func @_gnn_kernel(%arg0: memref<1312x128xbf16, #tpu.memory_space<vmem>>, %arg1: memref<16x128xf32, #tpu.memory_space<vmem>>) attributes {dimension_semantics = [], scalar_prefetch = 0 : i64, scratch_operands = 0 : i64, tpu.core_type = #tpu.core_type<tc>} {
    %c0 = arith.constant 0 : index
    %c0_0 = arith.constant 0 : index
    %0 = vector.load %arg0[%c0, %c0_0] : memref<1312x128xbf16, #tpu.memory_space<vmem>>, vector<16x128xbf16>
    %c16 = arith.constant 16 : index
    %c0_1 = arith.constant 0 : index
    %1 = vector.load %arg0[%c16, %c0_1] : memref<1312x128xbf16, #tpu.memory_space<vmem>>, vector<16x128xbf16>
    %c32 = arith.constant 32 : index
    %c0_2 = arith.constant 0 : index
    %2 = vector.load %arg0[%c32, %c0_2] : memref<1312x128xbf16, #tpu.memory_space<vmem>>, vector<32x32xbf16>
    %c32_3 = arith.constant 32 : index
    %c0_4 = arith.constant 0 : index
    %3 = vector.load %arg0[%c32_3, %c0_4] : memref<1312x128xbf16, #tpu.memory_space<vmem>>, vector<16x16xbf16>
    %c160 = arith.constant 160 : index
    %c0_5 = arith.constant 0 : index
    %4 = vector.load %arg0[%c160, %c0_5] : memref<1312x128xbf16, #tpu.memory_space<vmem>>, vector<128x128xbf16>
    %c288 = arith.constant 288 : index
    %c0_6 = arith.constant 0 : index
    %5 = vector.load %arg0[%c288, %c0_6] : memref<1312x128xbf16, #tpu.memory_space<vmem>>, vector<128x128xbf16>
    %c416 = arith.constant 416 : index
    %c0_7 = arith.constant 0 : index
    %6 = vector.load %arg0[%c416, %c0_7] : memref<1312x128xbf16, #tpu.memory_space<vmem>>, vector<128x128xbf16>
    %c544 = arith.constant 544 : index
    %c0_8 = arith.constant 0 : index
    %7 = vector.load %arg0[%c544, %c0_8] : memref<1312x128xbf16, #tpu.memory_space<vmem>>, vector<128x128xbf16>
    %c672 = arith.constant 672 : index
    %c0_9 = arith.constant 0 : index
    %8 = vector.load %arg0[%c672, %c0_9] : memref<1312x128xbf16, #tpu.memory_space<vmem>>, vector<128x128xbf16>
    %c800 = arith.constant 800 : index
    %c0_10 = arith.constant 0 : index
    %9 = vector.load %arg0[%c800, %c0_10] : memref<1312x128xbf16, #tpu.memory_space<vmem>>, vector<128x128xbf16>
    %c928 = arith.constant 928 : index
    %c0_11 = arith.constant 0 : index
    %10 = vector.load %arg0[%c928, %c0_11] : memref<1312x128xbf16, #tpu.memory_space<vmem>>, vector<128x128xbf16>
    %c1056 = arith.constant 1056 : index
    %c0_12 = arith.constant 0 : index
    %11 = vector.load %arg0[%c1056, %c0_12] : memref<1312x128xbf16, #tpu.memory_space<vmem>>, vector<128x128xbf16>
    %c1184 = arith.constant 1184 : index
    %c0_13 = arith.constant 0 : index
    %12 = vector.load %arg0[%c1184, %c0_13] : memref<1312x128xbf16, #tpu.memory_space<vmem>>, vector<128x128xbf16>
    %c64 = arith.constant 64 : index
    %c0_14 = arith.constant 0 : index
    %13 = vector.load %arg0[%c64, %c0_14] : memref<1312x128xbf16, #tpu.memory_space<vmem>>, vector<16x128xbf16>
    %14 = arith.extf %13 : vector<16x128xbf16> to vector<16x128xf32>
    %c80 = arith.constant 80 : index
    %c0_15 = arith.constant 0 : index
    %15 = vector.load %arg0[%c80, %c0_15] : memref<1312x128xbf16, #tpu.memory_space<vmem>>, vector<16x128xbf16>
    %16 = arith.extf %15 : vector<16x128xbf16> to vector<16x128xf32>
    %c96 = arith.constant 96 : index
    %c0_16 = arith.constant 0 : index
    %17 = vector.load %arg0[%c96, %c0_16] : memref<1312x128xbf16, #tpu.memory_space<vmem>>, vector<16x128xbf16>
    %18 = arith.extf %17 : vector<16x128xbf16> to vector<16x128xf32>
    %c112 = arith.constant 112 : index
    %c0_17 = arith.constant 0 : index
    %19 = vector.load %arg0[%c112, %c0_17] : memref<1312x128xbf16, #tpu.memory_space<vmem>>, vector<16x128xbf16>
    %20 = arith.extf %19 : vector<16x128xbf16> to vector<16x128xf32>
    %c128 = arith.constant 128 : index
    %c0_18 = arith.constant 0 : index
    %21 = vector.load %arg0[%c128, %c0_18] : memref<1312x128xbf16, #tpu.memory_space<vmem>>, vector<16x128xbf16>
    %22 = arith.extf %21 : vector<16x128xbf16> to vector<16x128xf32>
    %c144 = arith.constant 144 : index
    %c0_19 = arith.constant 0 : index
    %23 = vector.load %arg0[%c144, %c0_19] : memref<1312x128xbf16, #tpu.memory_space<vmem>>, vector<16x128xbf16>
    %24 = arith.extf %23 : vector<16x128xbf16> to vector<16x128xf32>
    %cst = arith.constant dense<0.000000e+00> : vector<16x128xf32>
    %25 = tpu.matmul %0, %4, %cst {dimension_numbers = #tpu.dot_dimension_numbers<[1], [0], [0], [1], [0, 0, 1, 1], [], []>} : vector<16x128xbf16>, vector<128x128xbf16>, vector<16x128xf32> -> vector<16x128xf32>
    %26 = arith.addf %25, %14 : vector<16x128xf32>
    %27 = arith.truncf %26 : vector<16x128xf32> to vector<16x128xbf16>
    %28 = tpu.concatenate %27, %1 in 0 : vector<16x128xbf16>, vector<16x128xbf16> -> vector<32x128xbf16>
    %cst_20 = arith.constant dense<0.000000e+00> : vector<32x128xf32>
    %29 = tpu.matmul %2, %28, %cst_20 {dimension_numbers = #tpu.dot_dimension_numbers<[1], [0], [0], [1], [0, 0, 1, 1], [], []>} : vector<32x32xbf16>, vector<32x128xbf16>, vector<32x128xf32> -> vector<32x128xf32>
    %30 = arith.truncf %29 : vector<32x128xf32> to vector<32x128xbf16>
    %31 = vector.extract_strided_slice %30 {offsets = [0, 0], sizes = [16, 128], strides = [1, 1]} : vector<32x128xbf16> to vector<16x128xbf16>
    %cst_21 = arith.constant dense<0.000000e+00> : vector<16x128xf32>
    %32 = tpu.matmul %31, %5, %cst_21 {dimension_numbers = #tpu.dot_dimension_numbers<[1], [0], [0], [1], [0, 0, 1, 1], [], []>} : vector<16x128xbf16>, vector<128x128xbf16>, vector<16x128xf32> -> vector<16x128xf32>
    %cst_22 = arith.constant dense<0.000000e+00> : vector<16x128xf32>
    %33 = tpu.matmul %1, %6, %cst_22 {dimension_numbers = #tpu.dot_dimension_numbers<[1], [0], [0], [1], [0, 0, 1, 1], [], []>} : vector<16x128xbf16>, vector<128x128xbf16>, vector<16x128xf32> -> vector<16x128xf32>
    %34 = arith.addf %32, %33 : vector<16x128xf32>
    %35 = arith.addf %34, %16 : vector<16x128xf32>
    %cst_23 = arith.constant 0.000000e+00 : f32
    %36 = vector.broadcast %cst_23 : f32 to vector<16x128xf32>
    %37 = arith.maximumf %35, %36 : vector<16x128xf32>
    %38 = vector.extract_strided_slice %30 {offsets = [16, 0], sizes = [16, 128], strides = [1, 1]} : vector<32x128xbf16> to vector<16x128xbf16>
    %cst_24 = arith.constant dense<0.000000e+00> : vector<16x128xf32>
    %39 = tpu.matmul %38, %7, %cst_24 {dimension_numbers = #tpu.dot_dimension_numbers<[1], [0], [0], [1], [0, 0, 1, 1], [], []>} : vector<16x128xbf16>, vector<128x128xbf16>, vector<16x128xf32> -> vector<16x128xf32>
    %cst_25 = arith.constant dense<0.000000e+00> : vector<16x128xf32>
    %40 = tpu.matmul %27, %8, %cst_25 {dimension_numbers = #tpu.dot_dimension_numbers<[1], [0], [0], [1], [0, 0, 1, 1], [], []>} : vector<16x128xbf16>, vector<128x128xbf16>, vector<16x128xf32> -> vector<16x128xf32>
    %41 = arith.addf %39, %40 : vector<16x128xf32>
    %42 = arith.addf %41, %18 : vector<16x128xf32>
    %cst_26 = arith.constant 0.000000e+00 : f32
    %43 = vector.broadcast %cst_26 : f32 to vector<16x128xf32>
    %44 = arith.maximumf %42, %43 : vector<16x128xf32>
    %45 = arith.truncf %37 : vector<16x128xf32> to vector<16x128xbf16>
    %46 = arith.truncf %44 : vector<16x128xf32> to vector<16x128xbf16>
    %cst_27 = arith.constant dense<0.000000e+00> : vector<16x128xf32>
    %47 = tpu.matmul %3, %46, %cst_27 {dimension_numbers = #tpu.dot_dimension_numbers<[1], [0], [0], [1], [0, 0, 1, 1], [], []>} : vector<16x16xbf16>, vector<16x128xbf16>, vector<16x128xf32> -> vector<16x128xf32>
    %48 = arith.truncf %47 : vector<16x128xf32> to vector<16x128xbf16>
    %cst_28 = arith.constant dense<0.000000e+00> : vector<16x128xf32>
    %49 = tpu.matmul %48, %9, %cst_28 {dimension_numbers = #tpu.dot_dimension_numbers<[1], [0], [0], [1], [0, 0, 1, 1], [], []>} : vector<16x128xbf16>, vector<128x128xbf16>, vector<16x128xf32> -> vector<16x128xf32>
    %cst_29 = arith.constant dense<0.000000e+00> : vector<16x128xf32>
    %50 = tpu.matmul %45, %10, %cst_29 {dimension_numbers = #tpu.dot_dimension_numbers<[1], [0], [0], [1], [0, 0, 1, 1], [], []>} : vector<16x128xbf16>, vector<128x128xbf16>, vector<16x128xf32> -> vector<16x128xf32>
    %51 = arith.addf %49, %50 : vector<16x128xf32>
    %52 = arith.addf %51, %20 : vector<16x128xf32>
    %cst_30 = arith.constant 0.000000e+00 : f32
    %53 = vector.broadcast %cst_30 : f32 to vector<16x128xf32>
    %54 = arith.maximumf %52, %53 : vector<16x128xf32>
    %55 = arith.truncf %54 : vector<16x128xf32> to vector<16x128xbf16>
    %cst_31 = arith.constant dense<0.000000e+00> : vector<16x128xf32>
    %56 = tpu.matmul %55, %11, %cst_31 {dimension_numbers = #tpu.dot_dimension_numbers<[1], [0], [0], [1], [0, 0, 1, 1], [], []>} : vector<16x128xbf16>, vector<128x128xbf16>, vector<16x128xf32> -> vector<16x128xf32>
    %57 = arith.addf %56, %22 : vector<16x128xf32>
    %cst_32 = arith.constant 0.000000e+00 : f32
    %58 = vector.broadcast %cst_32 : f32 to vector<16x128xf32>
    %59 = arith.maximumf %57, %58 : vector<16x128xf32>
    %60 = arith.truncf %59 : vector<16x128xf32> to vector<16x128xbf16>
    %cst_33 = arith.constant dense<0.000000e+00> : vector<16x128xf32>
    %61 = tpu.matmul %60, %12, %cst_33 {dimension_numbers = #tpu.dot_dimension_numbers<[1], [0], [0], [1], [0, 0, 1, 1], [], []>} : vector<16x128xbf16>, vector<128x128xbf16>, vector<16x128xf32> -> vector<16x128xf32>
    %62 = arith.addf %61, %24 : vector<16x128xf32>
    %c0_34 = arith.constant 0 : index
    %c0_35 = arith.constant 0 : index
    %63 = vector.load %arg1[%c0_34, %c0_35] : memref<16x128xf32, #tpu.memory_space<vmem>>, vector<16x128xf32>
    tpu.vector_store %arg1[%c0_34, %c0_35], %62 {strides = array<i32>} : memref<16x128xf32, #tpu.memory_space<vmem>>, vector<16x128xf32>,
    return
  }
}

</mosaic_0001>

<llo_original>
// kernel: tpu_custom_call.1
$region0: #{tpu_custom_call.1}
  #allocation0 [shape = 'u32[]', space=smem, size = 0x4, offset = 0x4, fixed_abs, tag = 'smem constant byte address 0x4 - core index']
  #allocation1 [shape = 'u32[144,128]{1,0:T(1,128)}', space=vmem, size = 0x12000, scoped, tag = 'internal scratch']
  %s0 = inlined_call_operand.hbm [shape: bf16[1312,128], index: 0, kind: input, shape index: {}]
  %s1 = inlined_call_operand.hbm [shape: f32[16,128], index: 1, kind: output, shape index: {}]
  %s2 = sld [smem:[#allocation0]]
  $region18: #{tpu_custom_call.1} parent=0
    _
  %s4 = ssub.s32 1, %s2
  %s5 = scalar_select 0, %s4, %s2
  $region1: #{tpu_custom_call.1} parent=0
    #allocation2 [shape = 'u8[335872]{0}', space=vmem, size = 0x52000, scoped, tag = 'input window, operand 0, single buffered']
    #allocation3 [shape = 's32[1]{0}', space=sflag, size = 0x4, scoped, tag = 'scoped memory for tpu_custom_call.1']
    #allocation4 [shape = 's32[1]{0}', space=sflag, size = 0x4, scoped, tag = 'scoped memory for tpu_custom_call.1']
    #allocation5 [shape = 'u8[8192]{0}', space=vmem, size = 0x2000, scoped, tag = 'output window, operand 0, single buffered']
    %6 = vsyncpa [#allocation3], 0
    %7 = vsyncpa [#allocation4], 0
    // Predicated region
    $region2: #{tpu_custom_call.1} parent=1 // pred_check
      _
    $region3: #{tpu_custom_call.1} parent=1 // pred_check_branch
      %9 = sbr.rel (0) target = $region5
    $region4: #{tpu_custom_call.1} parent=1 // pred_region
      %s11 = ssub.s32 10496, 10496
      %12 = vsyncadd [#allocation3], %s11
      %s13 = sshll.u32 [#allocation2], 4
      %s14 = int_to_ptr.vmem [resolvable:$true] %s13
      %19 = dma.hbm_to_vmem [thread:$0]  %s0, 10496, %s14, [#allocation3], 64, 64, 4
    $region5: #{tpu_custom_call.1} parent=1 // pred_fallthru
      _
    // Predicated region
    $region6: #{tpu_custom_call.1} parent=1 // pred_check
      _
    $region7: #{tpu_custom_call.1} parent=1 // pred_check_branch
      %21 = sbr.rel (0) target = $region9
    $region8: #{tpu_custom_call.1} parent=1 // pred_region
      %22 = dma.done [#allocation3], 10496
    $region9: #{tpu_custom_call.1} parent=1 // pred_fallthru
      _
    %v24 = vld [vmem:[#allocation2] sm:$0xf]
    %v25 = vld [vmem:[#allocation2 + $0x4] sm:$0xf]
    %v26 = vld [vmem:[#allocation2 + $0x8] sm:$0xf]
    %v27 = vld [vmem:[#allocation2 + $0xc] sm:$0xf]
    %v28 = vld [vmem:[#allocation2 + $0x10] sm:$0xf]
    %v29 = vld [vmem:[#allocation2 + $0x14] sm:$0xf]
    %v30 = vld [vmem:[#allocation2 + $0x18] sm:$0xf]
    %v31 = vld [vmem:[#allocation2 + $0x1c] sm:$0xf]
    %v32 = vld [vmem:[#allocation2 + $0x50] sm:$0xf]
    %v33 = vld [vmem:[#allocation2 + $0x54] sm:$0xf]
    %v34 = vld [vmem:[#allocation2 + $0x58] sm:$0xf]
    %v35 = vld [vmem:[#allocation2 + $0x5c] sm:$0xf]
    %v36 = vld [vmem:[#allocation2 + $0x60] sm:$0xf]
    %v37 = vld [vmem:[#allocation2 + $0x64] sm:$0xf]
    %v38 = vld [vmem:[#allocation2 + $0x68] sm:$0xf]
    %v39 = vld [vmem:[#allocation2 + $0x6c] sm:$0xf]
    %v40 = vld [vmem:[#allocation2 + $0x70] sm:$0xf]
    %v41 = vld [vmem:[#allocation2 + $0x74] sm:$0xf]
    %v42 = vld [vmem:[#allocation2 + $0x78] sm:$0xf]
    %v43 = vld [vmem:[#allocation2 + $0x7c] sm:$0xf]
    %v44 = vld [vmem:[#allocation2 + $0x80] sm:$0xf]
    %v45 = vld [vmem:[#allocation2 + $0x84] sm:$0xf]
    %v46 = vld [vmem:[#allocation2 + $0x88] sm:$0xf]
    %v47 = vld [vmem:[#allocation2 + $0x8c] sm:$0xf]
    %v48 = vld [vmem:[#allocation2 + $0x90] sm:$0xf]
    %v49 = vld [vmem:[#allocation2 + $0x94] sm:$0xf]
    %v50 = vld [vmem:[#allocation2 + $0x98] sm:$0xf]
    %v51 = vld [vmem:[#allocation2 + $0x9c] sm:$0xf]
    %v52 = vld [vmem:[#allocation2 + $0xa0] sm:$0xf]
    %v53 = vld [vmem:[#allocation2 + $0xa4] sm:$0xf]
    %v54 = vld [vmem:[#allocation2 + $0xa8] sm:$0xf]
    %v55 = vld [vmem:[#allocation2 + $0xac] sm:$0xf]
    %v56 = vld [vmem:[#allocation2 + $0xb0] sm:$0xf]
    %v57 = vld [vmem:[#allocation2 + $0xb4] sm:$0xf]
    %v58 = vld [vmem:[#allocation2 + $0xb8] sm:$0xf]
    %v59 = vld [vmem:[#allocation2 + $0xbc] sm:$0xf]
    %v60 = vld [vmem:[#allocation2 + $0xc0] sm:$0xf]
    %v61 = vld [vmem:[#allocation2 + $0xc4] sm:$0xf]
    %v62 = vld [vmem:[#allocation2 + $0xc8] sm:$0xf]
    %v63 = vld [vmem:[#allocation2 + $0xcc] sm:$0xf]
    %v64 = vld [vmem:[#allocation2 + $0xd0] sm:$0xf]
    %v65 = vld [vmem:[#allocation2 + $0xd4] sm:$0xf]
    %v66 = vld [vmem:[#allocation2 + $0xd8] sm:$0xf]
    %v67 = vld [vmem:[#allocation2 + $0xdc] sm:$0xf]
    %v68 = vld [vmem:[#allocation2 + $0xe0] sm:$0xf]
    %v69 = vld [vmem:[#allocation2 + $0xe4] sm:$0xf]
    %v70 = vld [vmem:[#allocation2 + $0xe8] sm:$0xf]
    %v71 = vld [vmem:[#allocation2 + $0xec] sm:$0xf]
    %v72 = vld [vmem:[#allocation2 + $0xf0] sm:$0xf]
    %v73 = vld [vmem:[#allocation2 + $0xf4] sm:$0xf]
    %v74 = vld [vmem:[#allocation2 + $0xf8] sm:$0xf]
    %v75 = vld [vmem:[#allocation2 + $0xfc] sm:$0xf]
    %v76 = vld [vmem:[#allocation2 + $0x100] sm:$0xf]
    %v77 = vld [vmem:[#allocation2 + $0x104] sm:$0xf]
    %v78 = vld [vmem:[#allocation2 + $0x108] sm:$0xf]
    %v79 = vld [vmem:[#allocation2 + $0x10c] sm:$0xf]
    %v80 = vld [vmem:[#allocation2 + $0x110] sm:$0xf]
    %v81 = vld [vmem:[#allocation2 + $0x114] sm:$0xf]
    %v82 = vld [vmem:[#allocation2 + $0x118] sm:$0xf]
    %v83 = vld [vmem:[#allocation2 + $0x11c] sm:$0xf]
    %v84 = vld [vmem:[#allocation2 + $0x120] sm:$0xf]
    %v85 = vld [vmem:[#allocation2 + $0x124] sm:$0xf]
    %v86 = vld [vmem:[#allocation2 + $0x128] sm:$0xf]
    %v87 = vld [vmem:[#allocation2 + $0x12c] sm:$0xf]
    %v88 = vld [vmem:[#allocation2 + $0x130] sm:$0xf]
    %v89 = vld [vmem:[#allocation2 + $0x134] sm:$0xf]
    %v90 = vld [vmem:[#allocation2 + $0x138] sm:$0xf]
    %v91 = vld [vmem:[#allocation2 + $0x13c] sm:$0xf]
    %v92 = vld [vmem:[#allocation2 + $0x140] sm:$0xf]
    %v93 = vld [vmem:[#allocation2 + $0x144] sm:$0xf]
    %v94 = vld [vmem:[#allocation2 + $0x148] sm:$0xf]
    %v95 = vld [vmem:[#allocation2 + $0x14c] sm:$0xf]
    %v96 = vld [vmem:[#allocation2 + $0x150] sm:$0xf]
    %v97 = vld [vmem:[#allocation2 + $0x154] sm:$0xf]
    %v98 = vld [vmem:[#allocation2 + $0x158] sm:$0xf]
    %v99 = vld [vmem:[#allocation2 + $0x15c] sm:$0xf]
    %v100 = vld [vmem:[#allocation2 + $0x160] sm:$0xf]
    %v101 = vld [vmem:[#allocation2 + $0x164] sm:$0xf]
    %v102 = vld [vmem:[#allocation2 + $0x168] sm:$0xf]
    %v103 = vld [vmem:[#allocation2 + $0x16c] sm:$0xf]
    %v104 = vld [vmem:[#allocation2 + $0x170] sm:$0xf]
    %v105 = vld [vmem:[#allocation2 + $0x174] sm:$0xf]
    %v106 = vld [vmem:[#allocation2 + $0x178] sm:$0xf]
    %v107 = vld [vmem:[#allocation2 + $0x17c] sm:$0xf]
    %v108 = vld [vmem:[#allocation2 + $0x180] sm:$0xf]
    %v109 = vld [vmem:[#allocation2 + $0x184] sm:$0xf]
    %v110 = vld [vmem:[#allocation2 + $0x188] sm:$0xf]
    %v111 = vld [vmem:[#allocation2 + $0x18c] sm:$0xf]
    %v112 = vld [vmem:[#allocation2 + $0x190] sm:$0xf]
    %v113 = vld [vmem:[#allocation2 + $0x194] sm:$0xf]
    %v114 = vld [vmem:[#allocation2 + $0x198] sm:$0xf]
    %v115 = vld [vmem:[#allocation2 + $0x19c] sm:$0xf]
    %v116 = vld [vmem:[#allocation2 + $0x1a0] sm:$0xf]
    %v117 = vld [vmem:[#allocation2 + $0x1a4] sm:$0xf]
    %v118 = vld [vmem:[#allocation2 + $0x1a8] sm:$0xf]
    %v119 = vld [vmem:[#allocation2 + $0x1ac] sm:$0xf]
    %v120 = vld [vmem:[#allocation2 + $0x1b0] sm:$0xf]
    %v121 = vld [vmem:[#allocation2 + $0x1b4] sm:$0xf]
    %v122 = vld [vmem:[#allocation2 + $0x1b8] sm:$0xf]
    %v123 = vld [vmem:[#allocation2 + $0x1bc] sm:$0xf]
    %v124 = vld [vmem:[#allocation2 + $0x1c0] sm:$0xf]
    %v125 = vld [vmem:[#allocation2 + $0x1c4] sm:$0xf]
    %v126 = vld [vmem:[#allocation2 + $0x1c8] sm:$0xf]
    %v127 = vld [vmem:[#allocation2 + $0x1cc] sm:$0xf]
    %v128 = vld [vmem:[#allocation2 + $0x1d0] sm:$0xf]
    %v129 = vld [vmem:[#allocation2 + $0x1d4] sm:$0xf]
    %v130 = vld [vmem:[#allocation2 + $0x1d8] sm:$0xf]
    %v131 = vld [vmem:[#allocation2 + $0x1dc] sm:$0xf]
    %v132 = vld [vmem:[#allocation2 + $0x1e0] sm:$0xf]
    %v133 = vld [vmem:[#allocation2 + $0x1e4] sm:$0xf]
    %v134 = vld [vmem:[#allocation2 + $0x1e8] sm:$0xf]
    %v135 = vld [vmem:[#allocation2 + $0x1ec] sm:$0xf]
    %v136 = vld [vmem:[#allocation2 + $0x1f0] sm:$0xf]
    %v137 = vld [vmem:[#allocation2 + $0x1f4] sm:$0xf]
    %v138 = vld [vmem:[#allocation2 + $0x1f8] sm:$0xf]
    %v139 = vld [vmem:[#allocation2 + $0x1fc] sm:$0xf]
    %v140 = vld [vmem:[#allocation2 + $0x200] sm:$0xf]
    %v141 = vld [vmem:[#allocation2 + $0x204] sm:$0xf]
    %v142 = vld [vmem:[#allocation2 + $0x208] sm:$0xf]
    %v143 = vld [vmem:[#allocation2 + $0x20c] sm:$0xf]
    %v144 = vld [vmem:[#allocation2 + $0x210] sm:$0xf]
    %v145 = vld [vmem:[#allocation2 + $0x214] sm:$0xf]
    %v146 = vld [vmem:[#allocation2 + $0x218] sm:$0xf]
    %v147 = vld [vmem:[#allocation2 + $0x21c] sm:$0xf]
    %v148 = vld [vmem:[#allocation2 + $0x220] sm:$0xf]
    %v149 = vld [vmem:[#allocation2 + $0x224] sm:$0xf]
    %v150 = vld [vmem:[#allocation2 + $0x228] sm:$0xf]
    %v151 = vld [vmem:[#allocation2 + $0x22c] sm:$0xf]
    %v152 = vld [vmem:[#allocation2 + $0x230] sm:$0xf]
    %v153 = vld [vmem:[#allocation2 + $0x234] sm:$0xf]
    %v154 = vld [vmem:[#allocation2 + $0x238] sm:$0xf]
    %v155 = vld [vmem:[#allocation2 + $0x23c] sm:$0xf]
    %v156 = vld [vmem:[#allocation2 + $0x240] sm:$0xf]
    %v157 = vld [vmem:[#allocation2 + $0x244] sm:$0xf]
    %v158 = vld [vmem:[#allocation2 + $0x248] sm:$0xf]
    %v159 = vld [vmem:[#allocation2 + $0x24c] sm:$0xf]
    %v160 = vld [vmem:[#allocation2 + $0x250] sm:$0xf]
    %v161 = vld [vmem:[#allocation2 + $0x254] sm:$0xf]
    %v162 = vld [vmem:[#allocation2 + $0x258] sm:$0xf]
    %v163 = vld [vmem:[#allocation2 + $0x25c] sm:$0xf]
    %v164 = vld [vmem:[#allocation2 + $0x260] sm:$0xf]
    %v165 = vld [vmem:[#allocation2 + $0x264] sm:$0xf]
    %v166 = vld [vmem:[#allocation2 + $0x268] sm:$0xf]
    %v167 = vld [vmem:[#allocation2 + $0x26c] sm:$0xf]
    %v168 = vld [vmem:[#allocation2 + $0x270] sm:$0xf]
    %v169 = vld [vmem:[#allocation2 + $0x274] sm:$0xf]
    %v170 = vld [vmem:[#allocation2 + $0x278] sm:$0xf]
    %v171 = vld [vmem:[#allocation2 + $0x27c] sm:$0xf]
    %v172 = vld [vmem:[#allocation2 + $0x280] sm:$0xf]
    %v173 = vld [vmem:[#allocation2 + $0x284] sm:$0xf]
    %v174 = vld [vmem:[#allocation2 + $0x288] sm:$0xf]
    %v175 = vld [vmem:[#allocation2 + $0x28c] sm:$0xf]
    %v176 = vld [vmem:[#allocation2 + $0x20] sm:$0xf]
    %v177 = vld [vmem:[#allocation2 + $0x24] sm:$0xf]
    %v178 = vunpack.c.l.bf16 %v176
    %v179 = vunpack.c.l.bf16 %v177
    %v180 = vld [vmem:[#allocation2 + $0x28] sm:$0xf]
    %v181 = vld [vmem:[#allocation2 + $0x2c] sm:$0xf]
    %v182 = vunpack.c.l.bf16 %v180
    %v183 = vunpack.c.l.bf16 %v181
    %v184 = vld [vmem:[#allocation2 + $0x30] sm:$0xf]
    %v185 = vld [vmem:[#allocation2 + $0x34] sm:$0xf]
    %v186 = vunpack.c.l.bf16 %v184
    %v187 = vunpack.c.l.bf16 %v185
    %v188 = vld [vmem:[#allocation2 + $0x38] sm:$0xf]
    %v189 = vld [vmem:[#allocation2 + $0x3c] sm:$0xf]
    %v190 = vunpack.c.l.bf16 %v188
    %v191 = vunpack.c.l.bf16 %v189
    %v192 = vld [vmem:[#allocation2 + $0x40] sm:$0xf]
    %v193 = vld [vmem:[#allocation2 + $0x44] sm:$0xf]
    %v194 = vunpack.c.l.bf16 %v192
    %v195 = vunpack.c.l.bf16 %v193
    %v196 = vld [vmem:[#allocation2 + $0x48] sm:$0xf]
    %v197 = vld [vmem:[#allocation2 + $0x4c] sm:$0xf]
    %v198 = vunpack.c.l.bf16 %v196
    %v199 = vunpack.c.l.bf16 %v197
    %v202 = vunpack.c.l.b16 %v24
    %v203 = vunpack.c.l.b16 %v25
    %v204 = vpack.c.b16 %v203, %v202
    %v222 = vunpack.c.l.b16 %v32
    %v223 = vunpack.c.l.b16 %v33
    %v224 = vunpack.c.l.b16 %v34
    %v225 = vunpack.c.l.b16 %v35
    %v226 = vunpack.c.l.b16 %v36
    %v227 = vunpack.c.l.b16 %v37
    %v228 = vunpack.c.l.b16 %v38
    %v229 = vunpack.c.l.b16 %v39
    %v230 = vunpack.c.l.b16 %v40
    %v231 = vunpack.c.l.b16 %v41
    %v232 = vunpack.c.l.b16 %v42
    %v233 = vunpack.c.l.b16 %v43
    %v234 = vunpack.c.l.b16 %v44
    %v235 = vunpack.c.l.b16 %v45
    %v236 = vunpack.c.l.b16 %v46
    %v237 = vunpack.c.l.b16 %v47
    %v238 = vpack.c.b16 %v223, %v222
    %v239 = vpack.c.b16 %v225, %v224
    %v240 = vpack.c.b16 %v227, %v226
    %v241 = vpack.c.b16 %v229, %v228
    %v242 = vpack.c.b16 %v231, %v230
    %v243 = vpack.c.b16 %v233, %v232
    %v244 = vpack.c.b16 %v235, %v234
    %v245 = vpack.c.b16 %v237, %v236
    %254 = vmatprep.subr.bf16.mxu0 0
    %255 = vmatpush1.bf16.msra.mxu0 %v238
    %256 = vmatprep.subr.bf16.mxu0 0
    %257 = vmatpush1.bf16.msra.mxu0 %v239
    %258 = vmatprep.subr.bf16.mxu0 0
    %259 = vmatpush1.bf16.msra.mxu0 %v240
    %260 = vmatprep.subr.bf16.mxu0 0
    %261 = vmatpush1.bf16.msra.mxu0 %v241
    %262 = vmatprep.subr.bf16.mxu0 0
    %263 = vmatpush1.bf16.msra.mxu0 %v242
    %264 = vmatprep.subr.bf16.mxu0 0
    %265 = vmatpush1.bf16.msra.mxu0 %v243
    %266 = vmatprep.subr.bf16.mxu0 0
    %267 = vmatpush1.bf16.msra.mxu0 %v244
    %268 = vmatprep.subr.bf16.mxu0 0
    %269 = vmatpush1.bf16.msra.mxu0 %v245
    %270 = vmatprep.subr.bf16.mxu0 0
    %271 = vmatpush1.bf16.msra.mxu0 0
    %272 = vmatprep.subr.bf16.mxu0 0
    %273 = vmatpush1.bf16.msra.mxu0 0
    %274 = vmatprep.subr.bf16.mxu0 0
    %275 = vmatpush1.bf16.msra.mxu0 0
    %276 = vmatprep.subr.bf16.mxu0 0
    %277 = vmatpush1.bf16.msra.mxu0 0
    %278 = vmatprep.subr.bf16.mxu0 0
    %279 = vmatpush1.bf16.msra.mxu0 0
    %280 = vmatprep.subr.bf16.mxu0 0
    %281 = vmatpush1.bf16.msra.mxu0 0
    %282 = vmatprep.subr.bf16.mxu0 0
    %283 = vmatpush1.bf16.msra.mxu0 0
    %284 = vmatprep.subr.bf16.mxu0 0
    %285 = vmatpush1.bf16.msra.mxu0 0
    %286 = vmatprep.mubr.bf16.mxu0 0
    %287 = vmatmul.mubr.bf16.gmra.mrb[0].mxu0 %v204
    %v288 = vpop.f32.mrb[0].mxu0
    %v289 = vadd.f32 %v178, %v288
    %v290 = vpop.f32.mrb[0].mxu0
    %v291 = vpop.f32.mrb[0].mxu0
    %v292 = vadd.f32 %v179, %v291
    %v293 = vpop.f32.mrb[0].mxu0
    %294 = vdwg.mxu0
    %v295 = vpack.c.bf16 %v292, %v289
    %v298 = vunpack.c.l.b16 %v26
    %v299 = vunpack.c.l.b16 %v27
    %v300 = vpack.c.b16 %v299, %v298
    %v306 = vunpack.c.l.b16 %v28
    %v307 = vunpack.c.l.b16 %v29
    %v308 = vunpack.c.l.b16 %v30
    %v309 = vunpack.c.l.b16 %v31
    %v310 = vpack.c.b16 %v307, %v306
    %v311 = vpack.c.b16 %v309, %v308
    %vm312 = vcmask 261120
    %v314 = vsel %vm312, %v310, 0
    %v317 = vsel %vm312, %v311, 0
    %319 = vmatprep.subr.bf16.mxu0 0
    %320 = vmatpush1.bf16.msra.mxu0 %v295
    %321 = vmatprep.subr.bf16.mxu0 0
    %322 = vmatpush1.bf16.msra.mxu0 %v300
    %323 = vmatprep.subr.bf16.mxu0 0
    %324 = vmatpush1.bf16.msra.mxu0 0
    %325 = vmatprep.subr.bf16.mxu0 0
    %326 = vmatpush1.bf16.msra.mxu0 0
    %327 = vmatprep.subr.bf16.mxu0 0
    %328 = vmatpush1.bf16.msra.mxu0 0
    %329 = vmatprep.subr.bf16.mxu0 0
    %330 = vmatpush1.bf16.msra.mxu0 0
    %331 = vmatprep.subr.bf16.mxu0 0
    %332 = vmatpush1.bf16.msra.mxu0 0
    %333 = vmatprep.subr.bf16.mxu0 0
    %334 = vmatpush1.bf16.msra.mxu0 0
    %335 = vmatprep.subr.bf16.mxu0 0
    %336 = vmatpush1.bf16.msra.mxu0 0
    %337 = vmatprep.subr.bf16.mxu0 0
    %338 = vmatpush1.bf16.msra.mxu0 0
    %339 = vmatprep.subr.bf16.mxu0 0
    %340 = vmatpush1.bf16.msra.mxu0 0
    %341 = vmatprep.subr.bf16.mxu0 0
    %342 = vmatpush1.bf16.msra.mxu0 0
    %343 = vmatprep.subr.bf16.mxu0 0
    %344 = vmatpush1.bf16.msra.mxu0 0
    %345 = vmatprep.subr.bf16.mxu0 0
    %346 = vmatpush1.bf16.msra.mxu0 0
    %347 = vmatprep.subr.bf16.mxu0 0
    %348 = vmatpush1.bf16.msra.mxu0 0
    %349 = vmatprep.subr.bf16.mxu0 0
    %350 = vmatpush1.bf16.msra.mxu0 0
    %351 = vmatprep.mubr.bf16.mxu0 0
    %352 = vmatmul.mubr.bf16.gmra.mrb[0].mxu0 %v314
    %v353 = vpop.f32.mrb[0].mxu0
    %v354 = vadd.f32 0.0, %v353
    %v355 = vpop.f32.mrb[0].mxu0
    %v356 = vpop.f32.mrb[0].mxu0
    %v357 = vadd.f32 0.0, %v356
    %v358 = vpop.f32.mrb[0].mxu0
    %359 = vmatprep.mubr.bf16.mxu0 0
    %360 = vmatmul.mubr.bf16.gmra.mrb[0].mxu0 %v317
    %v361 = vpop.f32.mrb[0].mxu0
    %v362 = vadd.f32 0.0, %v361
    %v363 = vpop.f32.mrb[0].mxu0
    %v364 = vpop.f32.mrb[0].mxu0
    %v365 = vadd.f32 0.0, %v364
    %v366 = vpop.f32.mrb[0].mxu0
    %367 = vdwg.mxu0
    %v368 = vpack.c.bf16 %v357, %v354
    %v369 = vpack.c.bf16 %v365, %v362
    %v386 = vunpack.c.l.b16 %v64
    %v387 = vunpack.c.l.b16 %v65
    %v388 = vunpack.c.l.b16 %v66
    %v389 = vunpack.c.l.b16 %v67
    %v390 = vunpack.c.l.b16 %v68
    %v391 = vunpack.c.l.b16 %v69
    %v392 = vunpack.c.l.b16 %v70
    %v393 = vunpack.c.l.b16 %v71
    %v394 = vunpack.c.l.b16 %v72
    %v395 = vunpack.c.l.b16 %v73
    %v396 = vunpack.c.l.b16 %v74
    %v397 = vunpack.c.l.b16 %v75
    %v398 = vunpack.c.l.b16 %v76
    %v399 = vunpack.c.l.b16 %v77
    %v400 = vunpack.c.l.b16 %v78
    %v401 = vunpack.c.l.b16 %v79
    %v402 = vpack.c.b16 %v387, %v386
    %v403 = vpack.c.b16 %v389, %v388
    %v404 = vpack.c.b16 %v391, %v390
    %v405 = vpack.c.b16 %v393, %v392
    %v406 = vpack.c.b16 %v395, %v394
    %v407 = vpack.c.b16 %v397, %v396
    %v408 = vpack.c.b16 %v399, %v398
    %v409 = vpack.c.b16 %v401, %v400
    %418 = vmatprep.subr.bf16.mxu0 0
    %419 = vmatpush1.bf16.msra.mxu0 %v402
    %420 = vmatprep.subr.bf16.mxu0 0
    %421 = vmatpush1.bf16.msra.mxu0 %v403
    %422 = vmatprep.subr.bf16.mxu0 0
    %423 = vmatpush1.bf16.msra.mxu0 %v404
    %424 = vmatprep.subr.bf16.mxu0 0
    %425 = vmatpush1.bf16.msra.mxu0 %v405
    %426 = vmatprep.subr.bf16.mxu0 0
    %427 = vmatpush1.bf16.msra.mxu0 %v406
    %428 = vmatprep.subr.bf16.mxu0 0
    %429 = vmatpush1.bf16.msra.mxu0 %v407
    %430 = vmatprep.subr.bf16.mxu0 0
    %431 = vmatpush1.bf16.msra.mxu0 %v408
    %432 = vmatprep.subr.bf16.mxu0 0
    %433 = vmatpush1.bf16.msra.mxu0 %v409
    %434 = vmatprep.subr.bf16.mxu0 0
    %435 = vmatpush1.bf16.msra.mxu0 0
    %436 = vmatprep.subr.bf16.mxu0 0
    %437 = vmatpush1.bf16.msra.mxu0 0
    %438 = vmatprep.subr.bf16.mxu0 0
    %439 = vmatpush1.bf16.msra.mxu0 0
    %440 = vmatprep.subr.bf16.mxu0 0
    %441 = vmatpush1.bf16.msra.mxu0 0
    %442 = vmatprep.subr.bf16.mxu0 0
    %443 = vmatpush1.bf16.msra.mxu0 0
    %444 = vmatprep.subr.bf16.mxu0 0
    %445 = vmatpush1.bf16.msra.mxu0 0
    %446 = vmatprep.subr.bf16.mxu0 0
    %447 = vmatpush1.bf16.msra.mxu0 0
    %448 = vmatprep.subr.bf16.mxu0 0
    %449 = vmatpush1.bf16.msra.mxu0 0
    %450 = vmatprep.mubr.bf16.mxu0 0
    %451 = vmatmul.mubr.bf16.gmra.mrb[0].mxu0 %v300
    %v452 = vpop.f32.mrb[0].mxu0
    %v453 = vadd.f32 0.0, %v452
    %v454 = vpop.f32.mrb[0].mxu0
    %v455 = vpop.f32.mrb[0].mxu0
    %v456 = vadd.f32 0.0, %v455
    %v457 = vpop.f32.mrb[0].mxu0
    %458 = vdwg.mxu0
    %v475 = vunpack.c.l.b16 %v48
    %v476 = vunpack.c.l.b16 %v49
    %v477 = vunpack.c.l.b16 %v50
    %v478 = vunpack.c.l.b16 %v51
    %v479 = vunpack.c.l.b16 %v52
    %v480 = vunpack.c.l.b16 %v53
    %v481 = vunpack.c.l.b16 %v54
    %v482 = vunpack.c.l.b16 %v55
    %v483 = vunpack.c.l.b16 %v56
    %v484 = vunpack.c.l.b16 %v57
    %v485 = vunpack.c.l.b16 %v58
    %v486 = vunpack.c.l.b16 %v59
    %v487 = vunpack.c.l.b16 %v60
    %v488 = vunpack.c.l.b16 %v61
    %v489 = vunpack.c.l.b16 %v62
    %v490 = vunpack.c.l.b16 %v63
    %v491 = vpack.c.b16 %v476, %v475
    %v492 = vpack.c.b16 %v478, %v477
    %v493 = vpack.c.b16 %v480, %v479
    %v494 = vpack.c.b16 %v482, %v481
    %v495 = vpack.c.b16 %v484, %v483
    %v496 = vpack.c.b16 %v486, %v485
    %v497 = vpack.c.b16 %v488, %v487
    %v498 = vpack.c.b16 %v490, %v489
    %507 = vmatprep.subr.bf16.mxu0 0
    %508 = vmatpush1.bf16.msra.mxu0 %v491
    %509 = vmatprep.subr.bf16.mxu0 0
    %510 = vmatpush1.bf16.msra.mxu0 %v492
    %511 = vmatprep.subr.bf16.mxu0 0
    %512 = vmatpush1.bf16.msra.mxu0 %v493
    %513 = vmatprep.subr.bf16.mxu0 0
    %514 = vmatpush1.bf16.msra.mxu0 %v494
    %515 = vmatprep.subr.bf16.mxu0 0
    %516 = vmatpush1.bf16.msra.mxu0 %v495
    %517 = vmatprep.subr.bf16.mxu0 0
    %518 = vmatpush1.bf16.msra.mxu0 %v496
    %519 = vmatprep.subr.bf16.mxu0 0
    %520 = vmatpush1.bf16.msra.mxu0 %v497
    %521 = vmatprep.subr.bf16.mxu0 0
    %522 = vmatpush1.bf16.msra.mxu0 %v498
    %523 = vmatprep.subr.bf16.mxu0 0
    %524 = vmatpush1.bf16.msra.mxu0 0
    %525 = vmatprep.subr.bf16.mxu0 0
    %526 = vmatpush1.bf16.msra.mxu0 0
    %527 = vmatprep.subr.bf16.mxu0 0
    %528 = vmatpush1.bf16.msra.mxu0 0
    %529 = vmatprep.subr.bf16.mxu0 0
    %530 = vmatpush1.bf16.msra.mxu0 0
    %531 = vmatprep.subr.bf16.mxu0 0
    %532 = vmatpush1.bf16.msra.mxu0 0
    %533 = vmatprep.subr.bf16.mxu0 0
    %534 = vmatpush1.bf16.msra.mxu0 0
    %535 = vmatprep.subr.bf16.mxu0 0
    %536 = vmatpush1.bf16.msra.mxu0 0
    %537 = vmatprep.subr.bf16.mxu0 0
    %538 = vmatpush1.bf16.msra.mxu0 0
    %539 = vmatprep.mubr.bf16.mxu0 0
    %540 = vmatmul.mubr.bf16.gmra.mrb[0].mxu0 %v368
    %v541 = vpop.f32.mrb[0].mxu0
    %v542 = vadd.f32 %v453, %v541
    %v543 = vpop.f32.mrb[0].mxu0
    %v544 = vpop.f32.mrb[0].mxu0
    %v545 = vadd.f32 %v456, %v544
    %v546 = vpop.f32.mrb[0].mxu0
    %547 = vdwg.mxu0
    %v548 = vadd.f32 %v542, %v182
    %v549 = vadd.f32 %v545, %v183
    %v550 = vmax.f32 %v548, 0.0
    %v551 = vmax.f32 %v549, 0.0
    %v568 = vunpack.c.l.b16 %v96
    %v569 = vunpack.c.l.b16 %v97
    %v570 = vunpack.c.l.b16 %v98
    %v571 = vunpack.c.l.b16 %v99
    %v572 = vunpack.c.l.b16 %v100
    %v573 = vunpack.c.l.b16 %v101
    %v574 = vunpack.c.l.b16 %v102
    %v575 = vunpack.c.l.b16 %v103
    %v576 = vunpack.c.l.b16 %v104
    %v577 = vunpack.c.l.b16 %v105
    %v578 = vunpack.c.l.b16 %v106
    %v579 = vunpack.c.l.b16 %v107
    %v580 = vunpack.c.l.b16 %v108
    %v581 = vunpack.c.l.b16 %v109
    %v582 = vunpack.c.l.b16 %v110
    %v583 = vunpack.c.l.b16 %v111
    %v584 = vpack.c.b16 %v569, %v568
    %v585 = vpack.c.b16 %v571, %v570
    %v586 = vpack.c.b16 %v573, %v572
    %v587 = vpack.c.b16 %v575, %v574
    %v588 = vpack.c.b16 %v577, %v576
    %v589 = vpack.c.b16 %v579, %v578
    %v590 = vpack.c.b16 %v581, %v580
    %v591 = vpack.c.b16 %v583, %v582
    %600 = vmatprep.subr.bf16.mxu0 0
    %601 = vmatpush1.bf16.msra.mxu0 %v584
    %602 = vmatprep.subr.bf16.mxu0 0
    %603 = vmatpush1.bf16.msra.mxu0 %v585
    %604 = vmatprep.subr.bf16.mxu0 0
    %605 = vmatpush1.bf16.msra.mxu0 %v586
    %606 = vmatprep.subr.bf16.mxu0 0
    %607 = vmatpush1.bf16.msra.mxu0 %v587
    %608 = vmatprep.subr.bf16.mxu0 0
    %609 = vmatpush1.bf16.msra.mxu0 %v588
    %610 = vmatprep.subr.bf16.mxu0 0
    %611 = vmatpush1.bf16.msra.mxu0 %v589
    %612 = vmatprep.subr.bf16.mxu0 0
    %613 = vmatpush1.bf16.msra.mxu0 %v590
    %614 = vmatprep.subr.bf16.mxu0 0
    %615 = vmatpush1.bf16.msra.mxu0 %v591
    %616 = vmatprep.subr.bf16.mxu0 0
    %617 = vmatpush1.bf16.msra.mxu0 0
    %618 = vmatprep.subr.bf16.mxu0 0
    %619 = vmatpush1.bf16.msra.mxu0 0
    %620 = vmatprep.subr.bf16.mxu0 0
    %621 = vmatpush1.bf16.msra.mxu0 0
    %622 = vmatprep.subr.bf16.mxu0 0
    %623 = vmatpush1.bf16.msra.mxu0 0
    %624 = vmatprep.subr.bf16.mxu0 0
    %625 = vmatpush1.bf16.msra.mxu0 0
    %626 = vmatprep.subr.bf16.mxu0 0
    %627 = vmatpush1.bf16.msra.mxu0 0
    %628 = vmatprep.subr.bf16.mxu0 0
    %629 = vmatpush1.bf16.msra.mxu0 0
    %630 = vmatprep.subr.bf16.mxu0 0
    %631 = vmatpush1.bf16.msra.mxu0 0
    %632 = vmatprep.mubr.bf16.mxu0 0
    %633 = vmatmul.mubr.bf16.gmra.mrb[0].mxu0 %v295
    %v634 = vpop.f32.mrb[0].mxu0
    %v635 = vadd.f32 0.0, %v634
    %v636 = vpop.f32.mrb[0].mxu0
    %v637 = vpop.f32.mrb[0].mxu0
    %v638 = vadd.f32 0.0, %v637
    %v639 = vpop.f32.mrb[0].mxu0
    %640 = vdwg.mxu0
    %v657 = vunpack.c.l.b16 %v80
    %v658 = vunpack.c.l.b16 %v81
    %v659 = vunpack.c.l.b16 %v82
    %v660 = vunpack.c.l.b16 %v83
    %v661 = vunpack.c.l.b16 %v84
    %v662 = vunpack.c.l.b16 %v85
    %v663 = vunpack.c.l.b16 %v86
    %v664 = vunpack.c.l.b16 %v87
    %v665 = vunpack.c.l.b16 %v88
    %v666 = vunpack.c.l.b16 %v89
    %v667 = vunpack.c.l.b16 %v90
    %v668 = vunpack.c.l.b16 %v91
    %v669 = vunpack.c.l.b16 %v92
    %v670 = vunpack.c.l.b16 %v93
    %v671 = vunpack.c.l.b16 %v94
    %v672 = vunpack.c.l.b16 %v95
    %v673 = vpack.c.b16 %v658, %v657
    %v674 = vpack.c.b16 %v660, %v659
    %v675 = vpack.c.b16 %v662, %v661
    %v676 = vpack.c.b16 %v664, %v663
    %v677 = vpack.c.b16 %v666, %v665
    %v678 = vpack.c.b16 %v668, %v667
    %v679 = vpack.c.b16 %v670, %v669
    %v680 = vpack.c.b16 %v672, %v671
    %689 = vmatprep.subr.bf16.mxu0 0
    %690 = vmatpush1.bf16.msra.mxu0 %v673
    %691 = vmatprep.subr.bf16.mxu0 0
    %692 = vmatpush1.bf16.msra.mxu0 %v674
    %693 = vmatprep.subr.bf16.mxu0 0
    %694 = vmatpush1.bf16.msra.mxu0 %v675
    %695 = vmatprep.subr.bf16.mxu0 0
    %696 = vmatpush1.bf16.msra.mxu0 %v676
    %697 = vmatprep.subr.bf16.mxu0 0
    %698 = vmatpush1.bf16.msra.mxu0 %v677
    %699 = vmatprep.subr.bf16.mxu0 0
    %700 = vmatpush1.bf16.msra.mxu0 %v678
    %701 = vmatprep.subr.bf16.mxu0 0
    %702 = vmatpush1.bf16.msra.mxu0 %v679
    %703 = vmatprep.subr.bf16.mxu0 0
    %704 = vmatpush1.bf16.msra.mxu0 %v680
    %705 = vmatprep.subr.bf16.mxu0 0
    %706 = vmatpush1.bf16.msra.mxu0 0
    %707 = vmatprep.subr.bf16.mxu0 0
    %708 = vmatpush1.bf16.msra.mxu0 0
    %709 = vmatprep.subr.bf16.mxu0 0
    %710 = vmatpush1.bf16.msra.mxu0 0
    %711 = vmatprep.subr.bf16.mxu0 0
    %712 = vmatpush1.bf16.msra.mxu0 0
    %713 = vmatprep.subr.bf16.mxu0 0
    %714 = vmatpush1.bf16.msra.mxu0 0
    %715 = vmatprep.subr.bf16.mxu0 0
    %716 = vmatpush1.bf16.msra.mxu0 0
    %717 = vmatprep.subr.bf16.mxu0 0
    %718 = vmatpush1.bf16.msra.mxu0 0
    %719 = vmatprep.subr.bf16.mxu0 0
    %720 = vmatpush1.bf16.msra.mxu0 0
    %721 = vmatprep.mubr.bf16.mxu0 0
    %722 = vmatmul.mubr.bf16.gmra.mrb[0].mxu0 %v369
    %v723 = vpop.f32.mrb[0].mxu0
    %v724 = vadd.f32 %v635, %v723
    %v725 = vpop.f32.mrb[0].mxu0
    %v726 = vpop.f32.mrb[0].mxu0
    %v727 = vadd.f32 %v638, %v726
    %v728 = vpop.f32.mrb[0].mxu0
    %729 = vdwg.mxu0
    %v730 = vadd.f32 %v724, %v186
    %v731 = vadd.f32 %v727, %v187
    %v732 = vmax.f32 %v730, 0.0
    %v733 = vmax.f32 %v731, 0.0
    %v734 = vpack.c.bf16 %v551, %v550
    %v735 = vpack.c.bf16 %v733, %v732
    %vm736 = vcmask 130048
    %v737 = vsel %vm736, %v310, 0
    %739 = vmatprep.subr.bf16.mxu0 0
    %740 = vmatpush1.bf16.msra.mxu0 %v735
    %741 = vmatprep.subr.bf16.mxu0 0
    %742 = vmatpush1.bf16.msra.mxu0 0
    %743 = vmatprep.subr.bf16.mxu0 0
    %744 = vmatpush1.bf16.msra.mxu0 0
    %745 = vmatprep.subr.bf16.mxu0 0
    %746 = vmatpush1.bf16.msra.mxu0 0
    %747 = vmatprep.subr.bf16.mxu0 0
    %748 = vmatpush1.bf16.msra.mxu0 0
    %749 = vmatprep.subr.bf16.mxu0 0
    %750 = vmatpush1.bf16.msra.mxu0 0
    %751 = vmatprep.subr.bf16.mxu0 0
    %752 = vmatpush1.bf16.msra.mxu0 0
    %753 = vmatprep.subr.bf16.mxu0 0
    %754 = vmatpush1.bf16.msra.mxu0 0
    %755 = vmatprep.subr.bf16.mxu0 0
    %756 = vmatpush1.bf16.msra.mxu0 0
    %757 = vmatprep.subr.bf16.mxu0 0
    %758 = vmatpush1.bf16.msra.mxu0 0
    %759 = vmatprep.subr.bf16.mxu0 0
    %760 = vmatpush1.bf16.msra.mxu0 0
    %761 = vmatprep.subr.bf16.mxu0 0
    %762 = vmatpush1.bf16.msra.mxu0 0
    %763 = vmatprep.subr.bf16.mxu0 0
    %764 = vmatpush1.bf16.msra.mxu0 0
    %765 = vmatprep.subr.bf16.mxu0 0
    %766 = vmatpush1.bf16.msra.mxu0 0
    %767 = vmatprep.subr.bf16.mxu0 0
    %768 = vmatpush1.bf16.msra.mxu0 0
    %769 = vmatprep.subr.bf16.mxu0 0
    %770 = vmatpush1.bf16.msra.mxu0 0
    %771 = vmatprep.mubr.bf16.mxu0 0
    %772 = vmatmul.mubr.bf16.gmra.mrb[0].mxu0 %v737
    %v773 = vpop.f32.mrb[0].mxu0
    %v774 = vadd.f32 0.0, %v773
    %v775 = vpop.f32.mrb[0].mxu0
    %v776 = vpop.f32.mrb[0].mxu0
    %v777 = vadd.f32 0.0, %v776
    %v778 = vpop.f32.mrb[0].mxu0
    %779 = vdwg.mxu0
    %v780 = vpack.c.bf16 %v777, %v774
    %v797 = vunpack.c.l.b16 %v128
    %v798 = vunpack.c.l.b16 %v129
    %v799 = vunpack.c.l.b16 %v130
    %v800 = vunpack.c.l.b16 %v131
    %v801 = vunpack.c.l.b16 %v132
    %v802 = vunpack.c.l.b16 %v133
    %v803 = vunpack.c.l.b16 %v134
    %v804 = vunpack.c.l.b16 %v135
    %v805 = vunpack.c.l.b16 %v136
    %v806 = vunpack.c.l.b16 %v137
    %v807 = vunpack.c.l.b16 %v138
    %v808 = vunpack.c.l.b16 %v139
    %v809 = vunpack.c.l.b16 %v140
    %v810 = vunpack.c.l.b16 %v141
    %v811 = vunpack.c.l.b16 %v142
    %v812 = vunpack.c.l.b16 %v143
    %v813 = vpack.c.b16 %v798, %v797
    %v814 = vpack.c.b16 %v800, %v799
    %v815 = vpack.c.b16 %v802, %v801
    %v816 = vpack.c.b16 %v804, %v803
    %v817 = vpack.c.b16 %v806, %v805
    %v818 = vpack.c.b16 %v808, %v807
    %v819 = vpack.c.b16 %v810, %v809
    %v820 = vpack.c.b16 %v812, %v811
    %829 = vmatprep.subr.bf16.mxu0 0
    %830 = vmatpush1.bf16.msra.mxu0 %v813
    %831 = vmatprep.subr.bf16.mxu0 0
    %832 = vmatpush1.bf16.msra.mxu0 %v814
    %833 = vmatprep.subr.bf16.mxu0 0
    %834 = vmatpush1.bf16.msra.mxu0 %v815
    %835 = vmatprep.subr.bf16.mxu0 0
    %836 = vmatpush1.bf16.msra.mxu0 %v816
    %837 = vmatprep.subr.bf16.mxu0 0
    %838 = vmatpush1.bf16.msra.mxu0 %v817
    %839 = vmatprep.subr.bf16.mxu0 0
    %840 = vmatpush1.bf16.msra.mxu0 %v818
    %841 = vmatprep.subr.bf16.mxu0 0
    %842 = vmatpush1.bf16.msra.mxu0 %v819
    %843 = vmatprep.subr.bf16.mxu0 0
    %844 = vmatpush1.bf16.msra.mxu0 %v820
    %845 = vmatprep.subr.bf16.mxu0 0
    %846 = vmatpush1.bf16.msra.mxu0 0
    %847 = vmatprep.subr.bf16.mxu0 0
    %848 = vmatpush1.bf16.msra.mxu0 0
    %849 = vmatprep.subr.bf16.mxu0 0
    %850 = vmatpush1.bf16.msra.mxu0 0
    %851 = vmatprep.subr.bf16.mxu0 0
    %852 = vmatpush1.bf16.msra.mxu0 0
    %853 = vmatprep.subr.bf16.mxu0 0
    %854 = vmatpush1.bf16.msra.mxu0 0
    %855 = vmatprep.subr.bf16.mxu0 0
    %856 = vmatpush1.bf16.msra.mxu0 0
    %857 = vmatprep.subr.bf16.mxu0 0
    %858 = vmatpush1.bf16.msra.mxu0 0
    %859 = vmatprep.subr.bf16.mxu0 0
    %860 = vmatpush1.bf16.msra.mxu0 0
    %861 = vmatprep.mubr.bf16.mxu0 0
    %862 = vmatmul.mubr.bf16.gmra.mrb[0].mxu0 %v734
    %v863 = vpop.f32.mrb[0].mxu0
    %v864 = vadd.f32 0.0, %v863
    %v865 = vpop.f32.mrb[0].mxu0
    %v866 = vpop.f32.mrb[0].mxu0
    %v867 = vadd.f32 0.0, %v866
    %v868 = vpop.f32.mrb[0].mxu0
    %869 = vdwg.mxu0
    %v886 = vunpack.c.l.b16 %v112
    %v887 = vunpack.c.l.b16 %v113
    %v888 = vunpack.c.l.b16 %v114
    %v889 = vunpack.c.l.b16 %v115
    %v890 = vunpack.c.l.b16 %v116
    %v891 = vunpack.c.l.b16 %v117
    %v892 = vunpack.c.l.b16 %v118
    %v893 = vunpack.c.l.b16 %v119
    %v894 = vunpack.c.l.b16 %v120
    %v895 = vunpack.c.l.b16 %v121
    %v896 = vunpack.c.l.b16 %v122
    %v897 = vunpack.c.l.b16 %v123
    %v898 = vunpack.c.l.b16 %v124
    %v899 = vunpack.c.l.b16 %v125
    %v900 = vunpack.c.l.b16 %v126
    %v901 = vunpack.c.l.b16 %v127
    %v902 = vpack.c.b16 %v887, %v886
    %v903 = vpack.c.b16 %v889, %v888
    %v904 = vpack.c.b16 %v891, %v890
    %v905 = vpack.c.b16 %v893, %v892
    %v906 = vpack.c.b16 %v895, %v894
    %v907 = vpack.c.b16 %v897, %v896
    %v908 = vpack.c.b16 %v899, %v898
    %v909 = vpack.c.b16 %v901, %v900
    %918 = vmatprep.subr.bf16.mxu0 0
    %919 = vmatpush1.bf16.msra.mxu0 %v902
    %920 = vmatprep.subr.bf16.mxu0 0
    %921 = vmatpush1.bf16.msra.mxu0 %v903
    %922 = vmatprep.subr.bf16.mxu0 0
    %923 = vmatpush1.bf16.msra.mxu0 %v904
    %924 = vmatprep.subr.bf16.mxu0 0
    %925 = vmatpush1.bf16.msra.mxu0 %v905
    %926 = vmatprep.subr.bf16.mxu0 0
    %927 = vmatpush1.bf16.msra.mxu0 %v906
    %928 = vmatprep.subr.bf16.mxu0 0
    %929 = vmatpush1.bf16.msra.mxu0 %v907
    %930 = vmatprep.subr.bf16.mxu0 0
    %931 = vmatpush1.bf16.msra.mxu0 %v908
    %932 = vmatprep.subr.bf16.mxu0 0
    %933 = vmatpush1.bf16.msra.mxu0 %v909
    %934 = vmatprep.subr.bf16.mxu0 0
    %935 = vmatpush1.bf16.msra.mxu0 0
    %936 = vmatprep.subr.bf16.mxu0 0
    %937 = vmatpush1.bf16.msra.mxu0 0
    %938 = vmatprep.subr.bf16.mxu0 0
    %939 = vmatpush1.bf16.msra.mxu0 0
    %940 = vmatprep.subr.bf16.mxu0 0
    %941 = vmatpush1.bf16.msra.mxu0 0
    %942 = vmatprep.subr.bf16.mxu0 0
    %943 = vmatpush1.bf16.msra.mxu0 0
    %944 = vmatprep.subr.bf16.mxu0 0
    %945 = vmatpush1.bf16.msra.mxu0 0
    %946 = vmatprep.subr.bf16.mxu0 0
    %947 = vmatpush1.bf16.msra.mxu0 0
    %948 = vmatprep.subr.bf16.mxu0 0
    %949 = vmatpush1.bf16.msra.mxu0 0
    %950 = vmatprep.mubr.bf16.mxu0 0
    %951 = vmatmul.mubr.bf16.gmra.mrb[0].mxu0 %v780
    %v952 = vpop.f32.mrb[0].mxu0
    %v953 = vadd.f32 %v864, %v952
    %v954 = vpop.f32.mrb[0].mxu0
    %v955 = vpop.f32.mrb[0].mxu0
    %v956 = vadd.f32 %v867, %v955
    %v957 = vpop.f32.mrb[0].mxu0
    %958 = vdwg.mxu0
    %v959 = vadd.f32 %v953, %v190
    %v960 = vadd.f32 %v956, %v191
    %v961 = vmax.f32 %v959, 0.0
    %v962 = vmax.f32 %v960, 0.0
    %v963 = vpack.c.bf16 %v962, %v961
    %v980 = vunpack.c.l.b16 %v144
    %v981 = vunpack.c.l.b16 %v145
    %v982 = vunpack.c.l.b16 %v146
    %v983 = vunpack.c.l.b16 %v147
    %v984 = vunpack.c.l.b16 %v148
    %v985 = vunpack.c.l.b16 %v149
    %v986 = vunpack.c.l.b16 %v150
    %v987 = vunpack.c.l.b16 %v151
    %v988 = vunpack.c.l.b16 %v152
    %v989 = vunpack.c.l.b16 %v153
    %v990 = vunpack.c.l.b16 %v154
    %v991 = vunpack.c.l.b16 %v155
    %v992 = vunpack.c.l.b16 %v156
    %v993 = vunpack.c.l.b16 %v157
    %v994 = vunpack.c.l.b16 %v158
    %v995 = vunpack.c.l.b16 %v159
    %v996 = vpack.c.b16 %v981, %v980
    %v997 = vpack.c.b16 %v983, %v982
    %v998 = vpack.c.b16 %v985, %v984
    %v999 = vpack.c.b16 %v987, %v986
    %v1000 = vpack.c.b16 %v989, %v988
    %v1001 = vpack.c.b16 %v991, %v990
    %v1002 = vpack.c.b16 %v993, %v992
    %v1003 = vpack.c.b16 %v995, %v994
    %1012 = vmatprep.subr.bf16.mxu0 0
    %1013 = vmatpush1.bf16.msra.mxu0 %v996
    %1014 = vmatprep.subr.bf16.mxu0 0
    %1015 = vmatpush1.bf16.msra.mxu0 %v997
    %1016 = vmatprep.subr.bf16.mxu0 0
    %1017 = vmatpush1.bf16.msra.mxu0 %v998
    %1018 = vmatprep.subr.bf16.mxu0 0
    %1019 = vmatpush1.bf16.msra.mxu0 %v999
    %1020 = vmatprep.subr.bf16.mxu0 0
    %1021 = vmatpush1.bf16.msra.mxu0 %v1000
    %1022 = vmatprep.subr.bf16.mxu0 0
    %1023 = vmatpush1.bf16.msra.mxu0 %v1001
    %1024 = vmatprep.subr.bf16.mxu0 0
    %1025 = vmatpush1.bf16.msra.mxu0 %v1002
    %1026 = vmatprep.subr.bf16.mxu0 0
    %1027 = vmatpush1.bf16.msra.mxu0 %v1003
    %1028 = vmatprep.subr.bf16.mxu0 0
    %1029 = vmatpush1.bf16.msra.mxu0 0
    %1030 = vmatprep.subr.bf16.mxu0 0
    %1031 = vmatpush1.bf16.msra.mxu0 0
    %1032 = vmatprep.subr.bf16.mxu0 0
    %1033 = vmatpush1.bf16.msra.mxu0 0
    %1034 = vmatprep.subr.bf16.mxu0 0
    %1035 = vmatpush1.bf16.msra.mxu0 0
    %1036 = vmatprep.subr.bf16.mxu0 0
    %1037 = vmatpush1.bf16.msra.mxu0 0
    %1038 = vmatprep.subr.bf16.mxu0 0
    %1039 = vmatpush1.bf16.msra.mxu0 0
    %1040 = vmatprep.subr.bf16.mxu0 0
    %1041 = vmatpush1.bf16.msra.mxu0 0
    %1042 = vmatprep.subr.bf16.mxu0 0
    %1043 = vmatpush1.bf16.msra.mxu0 0
    %1044 = vmatprep.mubr.bf16.mxu0 0
    %1045 = vmatmul.mubr.bf16.gmra.mrb[0].mxu0 %v963
    %v1046 = vpop.f32.mrb[0].mxu0
    %v1047 = vadd.f32 %v194, %v1046
    %v1048 = vpop.f32.mrb[0].mxu0
    %v1049 = vpop.f32.mrb[0].mxu0
    %v1050 = vadd.f32 %v195, %v1049
    %v1051 = vpop.f32.mrb[0].mxu0
    %1052 = vdwg.mxu0
    %v1053 = vmax.f32 %v1047, 0.0
    %v1054 = vmax.f32 %v1050, 0.0
    %v1055 = vpack.c.bf16 %v1054, %v1053
    %v1072 = vunpack.c.l.b16 %v160
    %v1073 = vunpack.c.l.b16 %v161
    %v1074 = vunpack.c.l.b16 %v162
    %v1075 = vunpack.c.l.b16 %v163
    %v1076 = vunpack.c.l.b16 %v164
    %v1077 = vunpack.c.l.b16 %v165
    %v1078 = vunpack.c.l.b16 %v166
    %v1079 = vunpack.c.l.b16 %v167
    %v1080 = vunpack.c.l.b16 %v168
    %v1081 = vunpack.c.l.b16 %v169
    %v1082 = vunpack.c.l.b16 %v170
    %v1083 = vunpack.c.l.b16 %v171
    %v1084 = vunpack.c.l.b16 %v172
    %v1085 = vunpack.c.l.b16 %v173
    %v1086 = vunpack.c.l.b16 %v174
    %v1087 = vunpack.c.l.b16 %v175
    %v1088 = vpack.c.b16 %v1073, %v1072
    %v1089 = vpack.c.b16 %v1075, %v1074
    %v1090 = vpack.c.b16 %v1077, %v1076
    %v1091 = vpack.c.b16 %v1079, %v1078
    %v1092 = vpack.c.b16 %v1081, %v1080
    %v1093 = vpack.c.b16 %v1083, %v1082
    %v1094 = vpack.c.b16 %v1085, %v1084
    %v1095 = vpack.c.b16 %v1087, %v1086
    %1104 = vmatprep.subr.bf16.mxu0 0
    %1105 = vmatpush1.bf16.msra.mxu0 %v1088
    %1106 = vmatprep.subr.bf16.mxu0 0
    %1107 = vmatpush1.bf16.msra.mxu0 %v1089
    %1108 = vmatprep.subr.bf16.mxu0 0
    %1109 = vmatpush1.bf16.msra.mxu0 %v1090
    %1110 = vmatprep.subr.bf16.mxu0 0
    %1111 = vmatpush1.bf16.msra.mxu0 %v1091
    %1112 = vmatprep.subr.bf16.mxu0 0
    %1113 = vmatpush1.bf16.msra.mxu0 %v1092
    %1114 = vmatprep.subr.bf16.mxu0 0
    %1115 = vmatpush1.bf16.msra.mxu0 %v1093
    %1116 = vmatprep.subr.bf16.mxu0 0
    %1117 = vmatpush1.bf16.msra.mxu0 %v1094
    %1118 = vmatprep.subr.bf16.mxu0 0
    %1119 = vmatpush1.bf16.msra.mxu0 %v1095
    %1120 = vmatprep.subr.bf16.mxu0 0
    %1121 = vmatpush1.bf16.msra.mxu0 0
    %1122 = vmatprep.subr.bf16.mxu0 0
    %1123 = vmatpush1.bf16.msra.mxu0 0
    %1124 = vmatprep.subr.bf16.mxu0 0
    %1125 = vmatpush1.bf16.msra.mxu0 0
    %1126 = vmatprep.subr.bf16.mxu0 0
    %1127 = vmatpush1.bf16.msra.mxu0 0
    %1128 = vmatprep.subr.bf16.mxu0 0
    %1129 = vmatpush1.bf16.msra.mxu0 0
    %1130 = vmatprep.subr.bf16.mxu0 0
    %1131 = vmatpush1.bf16.msra.mxu0 0
    %1132 = vmatprep.subr.bf16.mxu0 0
    %1133 = vmatpush1.bf16.msra.mxu0 0
    %1134 = vmatprep.subr.bf16.mxu0 0
    %1135 = vmatpush1.bf16.msra.mxu0 0
    %1136 = vmatprep.mubr.bf16.mxu0 0
    %1137 = vmatmul.mubr.bf16.gmra.mrb[0].mxu0 %v1055
    %v1138 = vpop.f32.mrb[0].mxu0
    %v1139 = vadd.f32 %v198, %v1138
    %v1140 = vpop.f32.mrb[0].mxu0
    %v1141 = vpop.f32.mrb[0].mxu0
    %v1142 = vadd.f32 %v199, %v1141
    %v1143 = vpop.f32.mrb[0].mxu0
    %1144 = vdwg.mxu0
    %1145 = vst [vmem:[#allocation5] sm:$0xff] %v1139
    %1146 = vst [vmem:[#allocation5 + $0x8] sm:$0xff] %v1142
    // Predicated region
    $region10: #{tpu_custom_call.1} parent=1 // pred_check
      _
    $region11: #{tpu_custom_call.1} parent=1 // pred_check_branch
      %1148 = sbr.rel (0) target = $region13
    $region12: #{tpu_custom_call.1} parent=1 // pred_region
      %s1150 = ssub.s32 256, 256
      %1151 = vsyncadd [#allocation4], %s1150
      %s1152 = sshll.u32 [#allocation5], 4
      %s1153 = int_to_ptr.vmem [resolvable:$true] %s1152
      %1158 = dma.vmem_to_hbm [thread:$0]  %s1153, 256, %s1, [#allocation4], 128, 128, 8
    $region13: #{tpu_custom_call.1} parent=1 // pred_fallthru
      _
    // Predicated region
    $region14: #{tpu_custom_call.1} parent=1 // pred_check
      _
    $region15: #{tpu_custom_call.1} parent=1 // pred_check_branch
      %1160 = sbr.rel (0) target = $region17
    $region16: #{tpu_custom_call.1} parent=1 // pred_region
      %1161 = dma.done [#allocation4], 256
    $region17: #{tpu_custom_call.1} parent=1 // pred_fallthru
      _
    %1162 = vsyncpa [#allocation3], 1
    %1163 = vsyncpa [#allocation4], 1

</llo_original>
